<compile_context>
chip_gen: v5e
topology: v5e:2x2
jax: 0.10.0
libtpu: 0.0.40
codegen_flags: <defaults>
</compile_context>

<pallas_src>
import functools
import math

import jax
import jax.numpy as jnp
from jax.experimental import pallas as pl
from jax.experimental.pallas import tpu as pltpu


# ------------------------------ helpers -------------------------------------


def _round_up(x, m):
    return ((x + m - 1) // m) * m


def _lcm(a, b):
    return a * b // math.gcd(a, b)


def _pad2d(x, rows, cols):
    return jnp.pad(x, ((0, rows - x.shape[0]), (0, cols - x.shape[1])))


def _vmem_budget_bytes():
    """Generation-aware VMEM budget (v7x: 64 MiB physical, v5e/v6e: 128 MiB)."""
    phys = 64 << 20  # conservative fallback (v7x per-TensorCore VMEM)
    try:
        info = pltpu.get_tpu_info()
        phys = int(getattr(info, "vmem_capacity_bytes", phys))
    except Exception:
        pass
    return max(32 << 20, min(phys - (16 << 20), 112 << 20))


# --------------------------- Pallas kernels ---------------------------------


def _gcn_fused_kernel(a_ref, xw_ref, w2_ref, b1_ref, b2_ref, p_ref, o_ref):
    """Small-N fast path: everything VMEM-resident, A read from HBM once.

    pooled = pool @ ( A @ relu(A @ XW + b1) @ W2 + b2 )   (softmax done in XLA)
    """
    h = jnp.maximum(
        jnp.dot(a_ref[...], xw_ref[...], preferred_element_type=jnp.float32)
        + b1_ref[...],
        0.0,
    ).astype(jnp.bfloat16)
    hw = jnp.dot(h, w2_ref[...],
                 preferred_element_type=jnp.float32).astype(jnp.bfloat16)
    z = jnp.dot(a_ref[...], hw, preferred_element_type=jnp.float32) + b2_ref[...]
    o_ref[...] = jnp.dot(p_ref[...], z, preferred_element_type=jnp.float32)


def _gcn_layer1_kernel(a_ref, xw_ref, w2_ref, b1_ref, hw_ref, acc_ref, *, tk):
    """HW[i] = relu( sum_k A[i,k] @ XW[k] + b1 ) @ W2   (dropout(eval) = id).

    XW (= X @ W1, precomputed in XLA) and W2 are VMEM-resident (constant index
    map); only the (tm, tk) A tile streams from HBM each grid step.
    """
    k = pl.program_id(1)

    @pl.when(k == 0)
    def _():
        acc_ref[...] = jnp.zeros_like(acc_ref)

    start = pl.multiple_of(k * tk, tk)
    xw_k = xw_ref[pl.ds(start, tk), :]                        # (tk, ch_pad) bf16
    acc_ref[...] += jnp.dot(a_ref[...], xw_k,
                            preferred_element_type=jnp.float32)

    @pl.when(k == pl.num_programs(1) - 1)
    def _():
        h = jnp.maximum(acc_ref[...] + b1_ref[...], 0.0).astype(jnp.bfloat16)
        hw_ref[...] = jnp.dot(
            h, w2_ref[...], preferred_element_type=jnp.float32
        ).astype(hw_ref.dtype)


def _gcn_layer2_kernel(a_ref, hw_ref, b2_ref, p_ref, part_ref, acc_ref, *, tk):
    """part[i] = pool[:, i-tile] @ ( sum_k A[i,k] @ HW[k] + b2 ).

    Per-row-tile partial pooled outputs (no cross-i scratch accumulation), so
    the row axis can be "parallel" (v7x megacore).  Final sum + masked softmax
    happen in plain XLA.
    """
    k = pl.program_id(1)

    @pl.when(k == 0)
    def _():
        acc_ref[...] = jnp.zeros_like(acc_ref)

    start = pl.multiple_of(k * tk, tk)
    hw_k = hw_ref[pl.ds(start, tk), :]                        # (tk, co_pad) bf16
    acc_ref[...] += jnp.dot(a_ref[...], hw_k,
                            preferred_element_type=jnp.float32)

    @pl.when(k == pl.num_programs(1) - 1)
    def _():
        z = acc_ref[...] + b2_ref[...]                        # (tm, co_pad) f32
        part_ref[0] = jnp.dot(p_ref[...], z,
                              preferred_element_type=jnp.float32)


# ------------------------------ wrapper --------------------------------------


def gcn_forward(a_hat, x, w1, b1, w2, b2, pool, *, tm=256, tk=512,
                force_streaming=False):
    """Full GCN forward: conv1 -> ReLU -> dropout(eval) -> conv2 -> mean-pool -> softmax."""
    N = x.shape[0]
    B = pool.shape[0]
    c_hid = w1.shape[1]
    c_out = w2.shape[1]

    lane = 128
    ch_pad = _round_up(c_hid, lane)
    co_pad = _round_up(c_out, lane)
    b_pad = _round_up(B, 8)
    budget = _vmem_budget_bytes()

    bf16 = jnp.bfloat16
    # XW = X @ W1 hoisted to plain XLA: c_in is tiny, so doing it per (i,k)
    # grid step duplicates MXU work and would force padding X to 128 lanes in
    # HBM (32x inflation for c_in=4).
    xw = jnp.dot(x.astype(bf16), w1.astype(bf16),
                 preferred_element_type=jnp.float32).astype(bf16)
    w2_b = w2.astype(bf16)
    b1_r = b1.reshape(1, -1).astype(jnp.float32)
    b2_r = b2.reshape(1, -1).astype(jnp.float32)

    # ---------- small-N fused fast path: A read from HBM exactly once --------
    n_f = _round_up(N, lane)
    fused_bytes = (n_f * n_f * 2                  # A  bf16
                   + n_f * ch_pad * 2             # XW bf16
                   + b_pad * n_f * 4              # pool f32
                   + ch_pad * co_pad * 2          # W2
                   + n_f * ch_pad * 4             # H  intermediate (f32)
                   + n_f * co_pad * 6             # HW / Z intermediates
                   + b_pad * co_pad * 4)
    use_fused = (not force_streaming) and (2 * fused_bytes < budget)

    if use_fused:
        a_p = _pad2d(a_hat, n_f, n_f).astype(bf16)
        xw_p = _pad2d(xw, n_f, ch_pad)
        w2_p = _pad2d(w2_b, ch_pad, co_pad)
        b1_p = _pad2d(b1_r, 1, ch_pad)
        b2_p = _pad2d(b2_r, 1, co_pad)
        pool_p = _pad2d(pool, b_pad, n_f).astype(jnp.float32)

        vmem = pl.BlockSpec(memory_space=pltpu.MemorySpace.VMEM)
        pooled = pl.pallas_call(
            _gcn_fused_kernel,
            out_shape=jax.ShapeDtypeStruct((b_pad, co_pad), jnp.float32),
            in_specs=[vmem] * 6,
            out_specs=vmem,
            compiler_params=pltpu.CompilerParams(vmem_limit_bytes=budget),
        )(a_p, xw_p, w2_p, b1_p, b2_p, pool_p)
        return jax.nn.softmax(pooled[:B, :c_out], axis=1)

    # ---------- general path: two tiled/pipelined passes streaming A ---------
    n_pad = _round_up(N, _lcm(tm, tk))
    nt_i = n_pad // tm
    nt_k = n_pad // tk
    grid = (nt_i, nt_k)  # (row tile i, reduction tile k) — reduction last.

    a_p = _pad2d(a_hat, n_pad, n_pad).astype(bf16)
    xw_p = _pad2d(xw, n_pad, ch_pad)
    w2_p = _pad2d(w2_b, ch_pad, co_pad)
    b1_p = _pad2d(b1_r, 1, ch_pad)
    b2_p = _pad2d(b2_r, 1, co_pad)
    pool_p = _pad2d(pool, b_pad, n_pad).astype(jnp.float32)

    # TODO(synk): for graphs where the resident XW/HW slabs (~512 B/node)
    # exceed the VMEM budget, stream them per-k tile instead; and for large
    # sparse graphs replace the dense (N,N) A_hat with a scalar-prefetch
    # neighbor-table gather formulation (O(E) instead of O(N^2)).

    # Pass 1: HW = relu(A @ XW + b1) @ W2, stored bf16 in HBM.
    hw = pl.pallas_call(
        functools.partial(_gcn_layer1_kernel, tk=tk),
        out_shape=jax.ShapeDtypeStruct((n_pad, co_pad), bf16),
        grid_spec=pltpu.PrefetchScalarGridSpec(
            num_scalar_prefetch=0,
            grid=grid,
            in_specs=[
                pl.BlockSpec((tm, tk), lambda i, k: (i, k)),          # A tile
                pl.BlockSpec((n_pad, ch_pad), lambda i, k: (0, 0)),   # XW resident
                pl.BlockSpec((ch_pad, co_pad), lambda i, k: (0, 0)),  # W2 resident
                pl.BlockSpec((1, ch_pad), lambda i, k: (0, 0)),       # b1
            ],
            out_specs=pl.BlockSpec((tm, co_pad), lambda i, k: (i, 0)),
            scratch_shapes=[pltpu.VMEM((tm, ch_pad), jnp.float32)],
        ),
        compiler_params=pltpu.CompilerParams(
            dimension_semantics=("parallel", "arbitrary"),
            vmem_limit_bytes=budget,
        ),
    )(a_p, xw_p, w2_p, b1_p)

    # Pass 2: per-row-tile pooled partials of pool @ (A @ HW + b2).
    partials = pl.pallas_call(
        functools.partial(_gcn_layer2_kernel, tk=tk),
        out_shape=jax.ShapeDtypeStruct((nt_i, b_pad, co_pad), jnp.float32),
        grid_spec=pltpu.PrefetchScalarGridSpec(
            num_scalar_prefetch=0,
            grid=grid,
            in_specs=[
                pl.BlockSpec((tm, tk), lambda i, k: (i, k)),          # A tile
                pl.BlockSpec((n_pad, co_pad), lambda i, k: (0, 0)),   # HW resident
                pl.BlockSpec((1, co_pad), lambda i, k: (0, 0)),       # b2
                pl.BlockSpec((b_pad, tm), lambda i, k: (0, i)),       # pool cols i
            ],
            out_specs=pl.BlockSpec((1, b_pad, co_pad), lambda i, k: (i, 0, 0)),
            scratch_shapes=[pltpu.VMEM((tm, co_pad), jnp.float32)],
        ),
        compiler_params=pltpu.CompilerParams(
            dimension_semantics=("parallel", "arbitrary"),
            vmem_limit_bytes=budget,
        ),
    )(a_p, hw, b2_p, pool_p)

    pooled = partials.sum(axis=0)            # (b_pad, co_pad)
    return jax.nn.softmax(pooled[:B, :c_out], axis=1)


# ---------------- glue (plain JAX): graph -> dense operators ----------------


def build_norm_adj(edge_index, num_nodes):
    """D^-1/2 (A + I) D^-1/2 as a dense (N, N) float32 matrix (PyG GCNConv)."""
    src, dst = edge_index[0], edge_index[1]
    loops = jnp.arange(num_nodes, dtype=edge_index.dtype)
    src = jnp.concatenate([src, loops])
    dst = jnp.concatenate([dst, loops])
    a = jnp.zeros((num_nodes, num_nodes), jnp.float32).at[dst, src].add(1.0)
    deg = a.sum(axis=1)
    d_inv_sqrt = jnp.where(deg > 0, 1.0 / jnp.sqrt(deg), 0.0)
    return a * d_inv_sqrt[:, None] * d_inv_sqrt[None, :]


def build_mean_pool(batch, num_graphs):
    """(B, N) matrix so that pool @ z == global_mean_pool(z, batch)."""
    one_hot = (batch[None, :] == jnp.arange(num_graphs)[:, None]).astype(jnp.float32)
    counts = one_hot.sum(axis=1, keepdims=True)
    return one_hot / jnp.maximum(counts, 1.0)


def glorot(key, shape):
    fan_in, fan_out = shape
    limit = jnp.sqrt(6.0 / (fan_in + fan_out))
    return jax.random.uniform(key, shape, jnp.float32, -limit, limit)


if __name__ == "__main__":
    key = jax.random.PRNGKey(0)
    k_x, k_e, k_w1, k_w2 = jax.random.split(key, 4)

    # Small synthetic batch: 2 graphs x 128 nodes.
    NODES_PER_GRAPH, B = 128, 2
    N = NODES_PER_GRAPH * B
    C_IN, C_HID, C_OUT, E = 4, 32, 8, 512

    x = jax.random.normal(k_x, (N, C_IN), jnp.float32)
    edge_index = jax.random.randint(k_e, (2, E), 0, N, jnp.int32)
    batch = jnp.repeat(jnp.arange(B, dtype=jnp.int32), NODES_PER_GRAPH)

    # GCNConv params: weight (C_in, C_out), bias zeros.
    w1 = glorot(k_w1, (C_IN, C_HID))
    b1 = jnp.zeros((C_HID,), jnp.float32)
    w2 = glorot(k_w2, (C_HID, C_OUT))
    b2 = jnp.zeros((C_OUT,), jnp.float32)

    a_hat = build_norm_adj(edge_index, N)
    pool = build_mean_pool(batch, B)

    # Fused small-N fast path (auto-selected) and the general streaming path.
    out_fused = jax.block_until_ready(
        gcn_forward(a_hat, x, w1, b1, w2, b2, pool))
    out_stream = jax.block_until_ready(
        gcn_forward(a_hat, x, w1, b1, w2, b2, pool, force_streaming=True))

    # Reference in plain JAX, mirroring the kernels' bf16/f32 mixed precision.
    bf16, f32 = jnp.bfloat16, jnp.float32
    xw = jnp.dot(x.astype(bf16), w1.astype(bf16),
                 preferred_element_type=f32).astype(bf16)
    h_chk = jnp.maximum(
        jnp.dot(a_hat.astype(bf16), xw, preferred_element_type=f32) + b1, 0.0
    ).astype(bf16)
    hw_chk = jnp.dot(h_chk, w2.astype(bf16),
                     preferred_element_type=f32).astype(bf16)
    z_chk = jnp.dot(a_hat.astype(bf16), hw_chk, preferred_element_type=f32) + b2
    ref = jax.nn.softmax(pool @ z_chk, axis=1)

    for out in (out_fused, out_stream):
        assert out.shape == (B, C_OUT)
        assert jnp.allclose(out, ref, atol=2e-2, rtol=2e-2)
        assert jnp.allclose(out.sum(axis=1), 1.0, atol=1e-3)

    print("KERNEL_OK")
</pallas_src>

<mosaic_0001>
module attributes {stable_mosaic.version = 11 : i64} {
  func.func @_gcn_fused_kernel(%arg0: memref<256x256xbf16, #tpu.memory_space<vmem>>, %arg1: memref<256x128xbf16, #tpu.memory_space<vmem>>, %arg2: memref<128x128xbf16, #tpu.memory_space<vmem>>, %arg3: memref<1x128xf32, #tpu.memory_space<vmem>>, %arg4: memref<1x128xf32, #tpu.memory_space<vmem>>, %arg5: memref<8x256xf32, #tpu.memory_space<vmem>>, %arg6: memref<8x128xf32, #tpu.memory_space<vmem>>) attributes {dimension_semantics = [], scalar_prefetch = 0 : i64, scratch_operands = 0 : i64, tpu.core_type = #tpu.core_type<tc>} {
    %c0 = arith.constant 0 : index
    %c0_0 = arith.constant 0 : index
    %0 = vector.load %arg0[%c0, %c0_0] : memref<256x256xbf16, #tpu.memory_space<vmem>>, vector<256x256xbf16>
    %c0_1 = arith.constant 0 : index
    %c0_2 = arith.constant 0 : index
    %1 = vector.load %arg1[%c0_1, %c0_2] : memref<256x128xbf16, #tpu.memory_space<vmem>>, vector<256x128xbf16>
    %cst = arith.constant dense<0.000000e+00> : vector<256x128xf32>
    %2 = tpu.matmul %0, %1, %cst {dimension_numbers = #tpu.dot_dimension_numbers<[1], [0], [0], [1], [0, 0, 1, 1], [], []>} : vector<256x256xbf16>, vector<256x128xbf16>, vector<256x128xf32> -> vector<256x128xf32>
    %c0_3 = arith.constant 0 : index
    %c0_4 = arith.constant 0 : index
    %3 = vector.load %arg3[%c0_3, %c0_4] : memref<1x128xf32, #tpu.memory_space<vmem>>, vector<1x128xf32>
    %4 = vector.broadcast %3 : vector<1x128xf32> to vector<256x128xf32>
    %5 = arith.addf %2, %4 : vector<256x128xf32>
    %cst_5 = arith.constant 0.000000e+00 : f32
    %6 = vector.broadcast %cst_5 : f32 to vector<256x128xf32>
    %7 = arith.maximumf %5, %6 : vector<256x128xf32>
    %8 = arith.truncf %7 : vector<256x128xf32> to vector<256x128xbf16>
    %c0_6 = arith.constant 0 : index
    %c0_7 = arith.constant 0 : index
    %9 = vector.load %arg2[%c0_6, %c0_7] : memref<128x128xbf16, #tpu.memory_space<vmem>>, vector<128x128xbf16>
    %cst_8 = arith.constant dense<0.000000e+00> : vector<256x128xf32>
    %10 = tpu.matmul %8, %9, %cst_8 {dimension_numbers = #tpu.dot_dimension_numbers<[1], [0], [0], [1], [0, 0, 1, 1], [], []>} : vector<256x128xbf16>, vector<128x128xbf16>, vector<256x128xf32> -> vector<256x128xf32>
    %11 = arith.truncf %10 : vector<256x128xf32> to vector<256x128xbf16>
    %c0_9 = arith.constant 0 : index
    %c0_10 = arith.constant 0 : index
    %12 = vector.load %arg0[%c0_9, %c0_10] : memref<256x256xbf16, #tpu.memory_space<vmem>>, vector<256x256xbf16>
    %cst_11 = arith.constant dense<0.000000e+00> : vector<256x128xf32>
    %13 = tpu.matmul %12, %11, %cst_11 {dimension_numbers = #tpu.dot_dimension_numbers<[1], [0], [0], [1], [0, 0, 1, 1], [], []>} : vector<256x256xbf16>, vector<256x128xbf16>, vector<256x128xf32> -> vector<256x128xf32>
    %c0_12 = arith.constant 0 : index
    %c0_13 = arith.constant 0 : index
    %14 = vector.load %arg4[%c0_12, %c0_13] : memref<1x128xf32, #tpu.memory_space<vmem>>, vector<1x128xf32>
    %15 = vector.broadcast %14 : vector<1x128xf32> to vector<256x128xf32>
    %16 = arith.addf %13, %15 : vector<256x128xf32>
    %c0_14 = arith.constant 0 : index
    %c0_15 = arith.constant 0 : index
    %17 = vector.load %arg5[%c0_14, %c0_15] : memref<8x256xf32, #tpu.memory_space<vmem>>, vector<8x256xf32>
    %cst_16 = arith.constant dense<0.000000e+00> : vector<8x128xf32>
    %18 = tpu.matmul %17, %16, %cst_16 {dimension_numbers = #tpu.dot_dimension_numbers<[1], [0], [0], [1], [0, 0, 1, 1], [], []>} : vector<8x256xf32>, vector<256x128xf32>, vector<8x128xf32> -> vector<8x128xf32>
    %c0_17 = arith.constant 0 : index
    %c0_18 = arith.constant 0 : index
    %19 = vector.load %arg6[%c0_17, %c0_18] : memref<8x128xf32, #tpu.memory_space<vmem>>, vector<8x128xf32>
    tpu.vector_store %arg6[%c0_17, %c0_18], %18 {strides = array<i32>} : memref<8x128xf32, #tpu.memory_space<vmem>>, vector<8x128xf32>,
    return
  }
}

</mosaic_0001>

<llo_original>
// kernel: tpu_custom_call.1
$region0: #{tpu_custom_call.1}
  #allocation0 [shape = 'u32[]', space=smem, size = 0x4, offset = 0x4, fixed_abs, tag = 'smem constant byte address 0x4 - core index']
  #allocation1 [shape = 'u32[72,128]{1,0:T(1,128)}', space=vmem, size = 0x9000, scoped, tag = 'internal scratch']
  %s0 = inlined_call_operand.hbm [shape: bf16[256,256], index: 0, kind: input, shape index: {}]
  %s1 = inlined_call_operand.hbm [shape: bf16[256,128], index: 1, kind: input, shape index: {}]
  %s2 = inlined_call_operand.hbm [shape: bf16[128,128], index: 2, kind: input, shape index: {}]
  %s3 = inlined_call_operand.vmem [shape: f32[1,128], index: 3, kind: input, shape index: {}]
  %s4 = inlined_call_operand.vmem [shape: f32[1,128], index: 4, kind: input, shape index: {}]
  %s5 = inlined_call_operand.hbm [shape: f32[8,256], index: 5, kind: input, shape index: {}]
  %s6 = inlined_call_operand.hbm [shape: f32[8,128], index: 6, kind: output, shape index: {}]
  %s7 = sld [smem:[#allocation0]]
  $region50: #{tpu_custom_call.1} parent=0
    _
  %s9 = ssub.s32 1, %s7
  %s10 = scalar_select 0, %s9, %s7
  $region1: #{tpu_custom_call.1} parent=0
    #allocation2 [shape = 'u8[131072]{0}', space=vmem, size = 0x20000, scoped, tag = 'input window, operand 0, single buffered']
    #allocation3 [shape = 's32[1]{0}', space=sflag, size = 0x4, scoped, tag = 'scoped memory for tpu_custom_call.1']
    #allocation4 [shape = 's32[1]{0}', space=sflag, size = 0x4, scoped, tag = 'scoped memory for tpu_custom_call.1']
    #allocation5 [shape = 'u8[65536]{0}', space=vmem, size = 0x10000, scoped, tag = 'input window, operand 1, single buffered']
    #allocation6 [shape = 's32[1]{0}', space=sflag, size = 0x4, scoped, tag = 'scoped memory for tpu_custom_call.1']
    #allocation7 [shape = 'u8[32768]{0}', space=vmem, size = 0x8000, scoped, tag = 'input window, operand 2, single buffered']
    #allocation8 [shape = 'u8[8192]{0}', space=vmem, size = 0x2000, scoped, tag = 'input window, operand 5, single buffered']
    #allocation9 [shape = 's32[1]{0}', space=sflag, size = 0x4, scoped, tag = 'scoped memory for tpu_custom_call.1']
    #allocation10 [shape = 'u8[4096]{0}', space=vmem, size = 0x1000, scoped, tag = 'output window, operand 0, single buffered']
    %11 = vsyncpa [#allocation3], 0
    %12 = vsyncpa [#allocation6], 0
    %13 = vsyncpa [#allocation9], 0
    %14 = vsyncpa [#allocation4], 0
    // Predicated region
    $region2: #{tpu_custom_call.1} parent=1 // pred_check
      _
    $region3: #{tpu_custom_call.1} parent=1 // pred_check_branch
      %16 = sbr.rel (0) target = $region5
    $region4: #{tpu_custom_call.1} parent=1 // pred_region
      %18 = vsyncadd [#allocation3], 0
      %s19 = sshll.u32 %s0, 4
      %s20 = int_to_ptr.hbm [resolvable:$true] %s19
      %s21 = sshll.u32 [#allocation2], 4
      %s22 = int_to_ptr.vmem [resolvable:$true] %s21
      %27 = dma.hbm_to_vmem [thread:$0]  %s20, 4096, %s22, [#allocation3], 128, 128, 8
    $region5: #{tpu_custom_call.1} parent=1 // pred_fallthru
      _
    // Predicated region
    $region6: #{tpu_custom_call.1} parent=1 // pred_check
      _
    $region7: #{tpu_custom_call.1} parent=1 // pred_check_branch
      %29 = sbr.rel (0) target = $region9
    $region8: #{tpu_custom_call.1} parent=1 // pred_region
      %31 = vsyncadd [#allocation6], 0
      %s32 = sshll.u32 %s1, 4
      %s33 = int_to_ptr.hbm [resolvable:$true] %s32
      %s34 = sshll.u32 [#allocation5], 4
      %s35 = int_to_ptr.vmem [resolvable:$true] %s34
      %40 = dma.hbm_to_vmem [thread:$0]  %s33, 2048, %s35, [#allocation6], 64, 64, 4
    $region9: #{tpu_custom_call.1} parent=1 // pred_fallthru
      _
    // Predicated region
    $region10: #{tpu_custom_call.1} parent=1 // pred_check
      _
    $region11: #{tpu_custom_call.1} parent=1 // pred_check_branch
      %42 = sbr.rel (0) target = $region13
    $region12: #{tpu_custom_call.1} parent=1 // pred_region
      %44 = vsyncadd [#allocation6], 0
      %s45 = sshll.u32 %s2, 4
      %s46 = int_to_ptr.hbm [resolvable:$true] %s45
      %s47 = sshll.u32 [#allocation7], 4
      %s48 = int_to_ptr.vmem [resolvable:$true] %s47
      %53 = dma.hbm_to_vmem [thread:$0]  %s46, 1024, %s48, [#allocation6], 64, 64, 4
    $region13: #{tpu_custom_call.1} parent=1 // pred_fallthru
      _
    // Predicated region
    $region14: #{tpu_custom_call.1} parent=1 // pred_check
      _
    $region15: #{tpu_custom_call.1} parent=1 // pred_check_branch
      %55 = sbr.rel (0) target = $region17
    $region16: #{tpu_custom_call.1} parent=1 // pred_region
      _
    $region17: #{tpu_custom_call.1} parent=1 // pred_fallthru
      _
    // Predicated region
    $region18: #{tpu_custom_call.1} parent=1 // pred_check
      _
    $region19: #{tpu_custom_call.1} parent=1 // pred_check_branch
      %57 = sbr.rel (0) target = $region21
    $region20: #{tpu_custom_call.1} parent=1 // pred_region
      _
    $region21: #{tpu_custom_call.1} parent=1 // pred_fallthru
      _
    // Predicated region
    $region22: #{tpu_custom_call.1} parent=1 // pred_check
      _
    $region23: #{tpu_custom_call.1} parent=1 // pred_check_branch
      %59 = sbr.rel (0) target = $region25
    $region24: #{tpu_custom_call.1} parent=1 // pred_region
      %61 = vsyncadd [#allocation9], 0
      %s63 = sshll.u32 %s5, 4
      %s64 = int_to_ptr.hbm [resolvable:$true] %s63
      %s65 = sshll.u32 [#allocation8], 4
      %s66 = int_to_ptr.vmem [resolvable:$true] %s65
      %68 = dma.hbm_to_vmem [thread:$0]  %s64, 256, %s66, [#allocation9]
    $region25: #{tpu_custom_call.1} parent=1 // pred_fallthru
      _
    // Predicated region
    $region26: #{tpu_custom_call.1} parent=1 // pred_check
      _
    $region27: #{tpu_custom_call.1} parent=1 // pred_check_branch
      %70 = sbr.rel (0) target = $region29
    $region28: #{tpu_custom_call.1} parent=1 // pred_region
      %72 = dma.done [#allocation3], 4096
    $region29: #{tpu_custom_call.1} parent=1 // pred_fallthru
      _
    // Predicated region
    $region30: #{tpu_custom_call.1} parent=1 // pred_check
      _
    $region31: #{tpu_custom_call.1} parent=1 // pred_check_branch
      %74 = sbr.rel (0) target = $region33
    $region32: #{tpu_custom_call.1} parent=1 // pred_region
      %76 = dma.done [#allocation6], 2048
    $region33: #{tpu_custom_call.1} parent=1 // pred_fallthru
      _
    // Predicated region
    $region34: #{tpu_custom_call.1} parent=1 // pred_check
      _
    $region35: #{tpu_custom_call.1} parent=1 // pred_check_branch
      %78 = sbr.rel (0) target = $region37
    $region36: #{tpu_custom_call.1} parent=1 // pred_region
      %80 = dma.done [#allocation6], 1024
    $region37: #{tpu_custom_call.1} parent=1 // pred_fallthru
      _
    // Predicated region
    $region38: #{tpu_custom_call.1} parent=1 // pred_check
      _
    $region39: #{tpu_custom_call.1} parent=1 // pred_check_branch
      %82 = sbr.rel (0) target = $region41
    $region40: #{tpu_custom_call.1} parent=1 // pred_region
      %84 = dma.done [#allocation9], 256
    $region41: #{tpu_custom_call.1} parent=1 // pred_fallthru
      _
    %v85 = vld [vmem:[#allocation2] sm:$0xff]
    %v86 = vld [vmem:[#allocation2 + $0x8] sm:$0xff]
    %v87 = vld [vmem:[#allocation2 + $0x10] sm:$0xff]
    %v88 = vld [vmem:[#allocation2 + $0x18] sm:$0xff]
    %v89 = vld [vmem:[#allocation2 + $0x20] sm:$0xff]
    %v90 = vld [vmem:[#allocation2 + $0x28] sm:$0xff]
    %v91 = vld [vmem:[#allocation2 + $0x30] sm:$0xff]
    %v92 = vld [vmem:[#allocation2 + $0x38] sm:$0xff]
    %v93 = vld [vmem:[#allocation2 + $0x40] sm:$0xff]
    %v94 = vld [vmem:[#allocation2 + $0x48] sm:$0xff]
    %v95 = vld [vmem:[#allocation2 + $0x50] sm:$0xff]
    %v96 = vld [vmem:[#allocation2 + $0x58] sm:$0xff]
    %v97 = vld [vmem:[#allocation2 + $0x60] sm:$0xff]
    %v98 = vld [vmem:[#allocation2 + $0x68] sm:$0xff]
    %v99 = vld [vmem:[#allocation2 + $0x70] sm:$0xff]
    %v100 = vld [vmem:[#allocation2 + $0x78] sm:$0xff]
    %v101 = vld [vmem:[#allocation2 + $0x80] sm:$0xff]
    %v102 = vld [vmem:[#allocation2 + $0x88] sm:$0xff]
    %v103 = vld [vmem:[#allocation2 + $0x90] sm:$0xff]
    %v104 = vld [vmem:[#allocation2 + $0x98] sm:$0xff]
    %v105 = vld [vmem:[#allocation2 + $0xa0] sm:$0xff]
    %v106 = vld [vmem:[#allocation2 + $0xa8] sm:$0xff]
    %v107 = vld [vmem:[#allocation2 + $0xb0] sm:$0xff]
    %v108 = vld [vmem:[#allocation2 + $0xb8] sm:$0xff]
    %v109 = vld [vmem:[#allocation2 + $0xc0] sm:$0xff]
    %v110 = vld [vmem:[#allocation2 + $0xc8] sm:$0xff]
    %v111 = vld [vmem:[#allocation2 + $0xd0] sm:$0xff]
    %v112 = vld [vmem:[#allocation2 + $0xd8] sm:$0xff]
    %v113 = vld [vmem:[#allocation2 + $0xe0] sm:$0xff]
    %v114 = vld [vmem:[#allocation2 + $0xe8] sm:$0xff]
    %v115 = vld [vmem:[#allocation2 + $0xf0] sm:$0xff]
    %v116 = vld [vmem:[#allocation2 + $0xf8] sm:$0xff]
    %v117 = vld [vmem:[#allocation5] sm:$0xf]
    %v118 = vld [vmem:[#allocation5 + $0x4] sm:$0xf]
    %v119 = vld [vmem:[#allocation5 + $0x8] sm:$0xf]
    %v120 = vld [vmem:[#allocation5 + $0xc] sm:$0xf]
    %v121 = vld [vmem:[#allocation5 + $0x10] sm:$0xf]
    %v122 = vld [vmem:[#allocation5 + $0x14] sm:$0xf]
    %v123 = vld [vmem:[#allocation5 + $0x18] sm:$0xf]
    %v124 = vld [vmem:[#allocation5 + $0x1c] sm:$0xf]
    %v125 = vld [vmem:[#allocation5 + $0x20] sm:$0xf]
    %v126 = vld [vmem:[#allocation5 + $0x24] sm:$0xf]
    %v127 = vld [vmem:[#allocation5 + $0x28] sm:$0xf]
    %v128 = vld [vmem:[#allocation5 + $0x2c] sm:$0xf]
    %v129 = vld [vmem:[#allocation5 + $0x30] sm:$0xf]
    %v130 = vld [vmem:[#allocation5 + $0x34] sm:$0xf]
    %v131 = vld [vmem:[#allocation5 + $0x38] sm:$0xf]
    %v132 = vld [vmem:[#allocation5 + $0x3c] sm:$0xf]
    %v133 = vld [vmem:[#allocation5 + $0x40] sm:$0xf]
    %v134 = vld [vmem:[#allocation5 + $0x44] sm:$0xf]
    %v135 = vld [vmem:[#allocation5 + $0x48] sm:$0xf]
    %v136 = vld [vmem:[#allocation5 + $0x4c] sm:$0xf]
    %v137 = vld [vmem:[#allocation5 + $0x50] sm:$0xf]
    %v138 = vld [vmem:[#allocation5 + $0x54] sm:$0xf]
    %v139 = vld [vmem:[#allocation5 + $0x58] sm:$0xf]
    %v140 = vld [vmem:[#allocation5 + $0x5c] sm:$0xf]
    %v141 = vld [vmem:[#allocation5 + $0x60] sm:$0xf]
    %v142 = vld [vmem:[#allocation5 + $0x64] sm:$0xf]
    %v143 = vld [vmem:[#allocation5 + $0x68] sm:$0xf]
    %v144 = vld [vmem:[#allocation5 + $0x6c] sm:$0xf]
    %v145 = vld [vmem:[#allocation5 + $0x70] sm:$0xf]
    %v146 = vld [vmem:[#allocation5 + $0x74] sm:$0xf]
    %v147 = vld [vmem:[#allocation5 + $0x78] sm:$0xf]
    %v148 = vld [vmem:[#allocation5 + $0x7c] sm:$0xf]
    %v149 = vld [vmem:[%s3] sm:$0x1]
    %v151 = vperm.slane %v149, 0
    %v185 = vunpack.c.l.b16 %v85
    %v186 = vunpack.c.h.b16 %v85
    %v187 = vunpack.c.l.b16 %v86
    %v188 = vunpack.c.h.b16 %v86
    %v189 = vunpack.c.l.b16 %v87
    %v190 = vunpack.c.h.b16 %v87
    %v191 = vunpack.c.l.b16 %v88
    %v192 = vunpack.c.h.b16 %v88
    %v193 = vunpack.c.l.b16 %v89
    %v194 = vunpack.c.h.b16 %v89
    %v195 = vunpack.c.l.b16 %v90
    %v196 = vunpack.c.h.b16 %v90
    %v197 = vunpack.c.l.b16 %v91
    %v198 = vunpack.c.h.b16 %v91
    %v199 = vunpack.c.l.b16 %v92
    %v200 = vunpack.c.h.b16 %v92
    %v201 = vunpack.c.l.b16 %v93
    %v202 = vunpack.c.h.b16 %v93
    %v203 = vunpack.c.l.b16 %v94
    %v204 = vunpack.c.h.b16 %v94
    %v205 = vunpack.c.l.b16 %v95
    %v206 = vunpack.c.h.b16 %v95
    %v207 = vunpack.c.l.b16 %v96
    %v208 = vunpack.c.h.b16 %v96
    %v209 = vunpack.c.l.b16 %v97
    %v210 = vunpack.c.h.b16 %v97
    %v211 = vunpack.c.l.b16 %v98
    %v212 = vunpack.c.h.b16 %v98
    %v213 = vunpack.c.l.b16 %v99
    %v214 = vunpack.c.h.b16 %v99
    %v215 = vunpack.c.l.b16 %v100
    %v216 = vunpack.c.h.b16 %v100
    %v217 = vunpack.c.l.b16 %v101
    %v218 = vunpack.c.h.b16 %v101
    %v219 = vunpack.c.l.b16 %v102
    %v220 = vunpack.c.h.b16 %v102
    %v221 = vunpack.c.l.b16 %v103
    %v222 = vunpack.c.h.b16 %v103
    %v223 = vunpack.c.l.b16 %v104
    %v224 = vunpack.c.h.b16 %v104
    %v225 = vunpack.c.l.b16 %v105
    %v226 = vunpack.c.h.b16 %v105
    %v227 = vunpack.c.l.b16 %v106
    %v228 = vunpack.c.h.b16 %v106
    %v229 = vunpack.c.l.b16 %v107
    %v230 = vunpack.c.h.b16 %v107
    %v231 = vunpack.c.l.b16 %v108
    %v232 = vunpack.c.h.b16 %v108
    %v233 = vunpack.c.l.b16 %v109
    %v234 = vunpack.c.h.b16 %v109
    %v235 = vunpack.c.l.b16 %v110
    %v236 = vunpack.c.h.b16 %v110
    %v237 = vunpack.c.l.b16 %v111
    %v238 = vunpack.c.h.b16 %v111
    %v239 = vunpack.c.l.b16 %v112
    %v240 = vunpack.c.h.b16 %v112
    %v241 = vunpack.c.l.b16 %v113
    %v242 = vunpack.c.h.b16 %v113
    %v243 = vunpack.c.l.b16 %v114
    %v244 = vunpack.c.h.b16 %v114
    %v245 = vunpack.c.l.b16 %v115
    %v246 = vunpack.c.h.b16 %v115
    %v247 = vunpack.c.l.b16 %v116
    %v248 = vunpack.c.h.b16 %v116
    %v249 = vpack.c.b16 %v187, %v185
    %v250 = vpack.c.b16 %v188, %v186
    %v251 = vpack.c.b16 %v191, %v189
    %v252 = vpack.c.b16 %v192, %v190
    %v253 = vpack.c.b16 %v195, %v193
    %v254 = vpack.c.b16 %v196, %v194
    %v255 = vpack.c.b16 %v199, %v197
    %v256 = vpack.c.b16 %v200, %v198
    %v257 = vpack.c.b16 %v203, %v201
    %v258 = vpack.c.b16 %v204, %v202
    %v259 = vpack.c.b16 %v207, %v205
    %v260 = vpack.c.b16 %v208, %v206
    %v261 = vpack.c.b16 %v211, %v209
    %v262 = vpack.c.b16 %v212, %v210
    %v263 = vpack.c.b16 %v215, %v213
    %v264 = vpack.c.b16 %v216, %v214
    %v265 = vpack.c.b16 %v219, %v217
    %v266 = vpack.c.b16 %v220, %v218
    %v267 = vpack.c.b16 %v223, %v221
    %v268 = vpack.c.b16 %v224, %v222
    %v269 = vpack.c.b16 %v227, %v225
    %v270 = vpack.c.b16 %v228, %v226
    %v271 = vpack.c.b16 %v231, %v229
    %v272 = vpack.c.b16 %v232, %v230
    %v273 = vpack.c.b16 %v235, %v233
    %v274 = vpack.c.b16 %v236, %v234
    %v275 = vpack.c.b16 %v239, %v237
    %v276 = vpack.c.b16 %v240, %v238
    %v277 = vpack.c.b16 %v243, %v241
    %v278 = vpack.c.b16 %v244, %v242
    %v279 = vpack.c.b16 %v247, %v245
    %v280 = vpack.c.b16 %v248, %v246
    %v345 = vunpack.c.l.b16 %v117
    %v346 = vunpack.c.l.b16 %v118
    %v347 = vunpack.c.l.b16 %v119
    %v348 = vunpack.c.l.b16 %v120
    %v349 = vunpack.c.l.b16 %v121
    %v350 = vunpack.c.l.b16 %v122
    %v351 = vunpack.c.l.b16 %v123
    %v352 = vunpack.c.l.b16 %v124
    %v353 = vunpack.c.l.b16 %v125
    %v354 = vunpack.c.l.b16 %v126
    %v355 = vunpack.c.l.b16 %v127
    %v356 = vunpack.c.l.b16 %v128
    %v357 = vunpack.c.l.b16 %v129
    %v358 = vunpack.c.l.b16 %v130
    %v359 = vunpack.c.l.b16 %v131
    %v360 = vunpack.c.l.b16 %v132
    %v361 = vunpack.c.l.b16 %v133
    %v362 = vunpack.c.l.b16 %v134
    %v363 = vunpack.c.l.b16 %v135
    %v364 = vunpack.c.l.b16 %v136
    %v365 = vunpack.c.l.b16 %v137
    %v366 = vunpack.c.l.b16 %v138
    %v367 = vunpack.c.l.b16 %v139
    %v368 = vunpack.c.l.b16 %v140
    %v369 = vunpack.c.l.b16 %v141
    %v370 = vunpack.c.l.b16 %v142
    %v371 = vunpack.c.l.b16 %v143
    %v372 = vunpack.c.l.b16 %v144
    %v373 = vunpack.c.l.b16 %v145
    %v374 = vunpack.c.l.b16 %v146
    %v375 = vunpack.c.l.b16 %v147
    %v376 = vunpack.c.l.b16 %v148
    %v377 = vpack.c.b16 %v346, %v345
    %v378 = vpack.c.b16 %v348, %v347
    %v379 = vpack.c.b16 %v350, %v349
    %v380 = vpack.c.b16 %v352, %v351
    %v381 = vpack.c.b16 %v354, %v353
    %v382 = vpack.c.b16 %v356, %v355
    %v383 = vpack.c.b16 %v358, %v357
    %v384 = vpack.c.b16 %v360, %v359
    %v385 = vpack.c.b16 %v362, %v361
    %v386 = vpack.c.b16 %v364, %v363
    %v387 = vpack.c.b16 %v366, %v365
    %v388 = vpack.c.b16 %v368, %v367
    %v389 = vpack.c.b16 %v370, %v369
    %v390 = vpack.c.b16 %v372, %v371
    %v391 = vpack.c.b16 %v374, %v373
    %v392 = vpack.c.b16 %v376, %v375
    %409 = vmatpush.bf16.msra.mxu0 %v384
    %410 = vmatpush.bf16.msra.mxu0 %v383
    %411 = vmatpush.bf16.msra.mxu0 %v382
    %412 = vmatpush.bf16.msra.mxu0 %v381
    %413 = vmatpush.bf16.msra.mxu0 %v380
    %414 = vmatpush.bf16.msra.mxu0 %v379
    %415 = vmatpush.bf16.msra.mxu0 %v378
    %416 = vmatpush.bf16.msra.mxu0 %v377
    %417 = vmatmul.bf16.gmra.mxu0 %v249
    %v418 = vpop.f32.mrf.mxu0
    %v419 = vadd.f32 %v151, %v418
    %v420 = vpop.f32.mrf.mxu0
    %v421 = vadd.f32 %v151, %v420
    %422 = vmatmul.bf16.gmra.mxu0 %v251
    %v423 = vpop.f32.mrf.mxu0
    %v424 = vadd.f32 %v151, %v423
    %v425 = vpop.f32.mrf.mxu0
    %v426 = vadd.f32 %v151, %v425
    %427 = vmatmul.bf16.gmra.mxu0 %v253
    %v428 = vpop.f32.mrf.mxu0
    %v429 = vadd.f32 %v151, %v428
    %v430 = vpop.f32.mrf.mxu0
    %v431 = vadd.f32 %v151, %v430
    %432 = vmatmul.bf16.gmra.mxu0 %v255
    %v433 = vpop.f32.mrf.mxu0
    %v434 = vadd.f32 %v151, %v433
    %v435 = vpop.f32.mrf.mxu0
    %v436 = vadd.f32 %v151, %v435
    %437 = vmatmul.bf16.gmra.mxu0 %v257
    %v438 = vpop.f32.mrf.mxu0
    %v439 = vadd.f32 %v151, %v438
    %v440 = vpop.f32.mrf.mxu0
    %v441 = vadd.f32 %v151, %v440
    %442 = vmatmul.bf16.gmra.mxu0 %v259
    %v443 = vpop.f32.mrf.mxu0
    %v444 = vadd.f32 %v151, %v443
    %v445 = vpop.f32.mrf.mxu0
    %v446 = vadd.f32 %v151, %v445
    %447 = vmatmul.bf16.gmra.mxu0 %v261
    %v448 = vpop.f32.mrf.mxu0
    %v449 = vadd.f32 %v151, %v448
    %v450 = vpop.f32.mrf.mxu0
    %v451 = vadd.f32 %v151, %v450
    %452 = vmatmul.bf16.gmra.mxu0 %v263
    %v453 = vpop.f32.mrf.mxu0
    %v454 = vadd.f32 %v151, %v453
    %v455 = vpop.f32.mrf.mxu0
    %v456 = vadd.f32 %v151, %v455
    %457 = vmatmul.bf16.gmra.mxu0 %v265
    %v458 = vpop.f32.mrf.mxu0
    %v459 = vadd.f32 %v151, %v458
    %v460 = vpop.f32.mrf.mxu0
    %v461 = vadd.f32 %v151, %v460
    %462 = vmatmul.bf16.gmra.mxu0 %v267
    %v463 = vpop.f32.mrf.mxu0
    %v464 = vadd.f32 %v151, %v463
    %v465 = vpop.f32.mrf.mxu0
    %v466 = vadd.f32 %v151, %v465
    %467 = vmatmul.bf16.gmra.mxu0 %v269
    %v468 = vpop.f32.mrf.mxu0
    %v469 = vadd.f32 %v151, %v468
    %v470 = vpop.f32.mrf.mxu0
    %v471 = vadd.f32 %v151, %v470
    %472 = vmatmul.bf16.gmra.mxu0 %v271
    %v473 = vpop.f32.mrf.mxu0
    %v474 = vadd.f32 %v151, %v473
    %v475 = vpop.f32.mrf.mxu0
    %v476 = vadd.f32 %v151, %v475
    %477 = vmatmul.bf16.gmra.mxu0 %v273
    %v478 = vpop.f32.mrf.mxu0
    %v479 = vadd.f32 %v151, %v478
    %v480 = vpop.f32.mrf.mxu0
    %v481 = vadd.f32 %v151, %v480
    %482 = vmatmul.bf16.gmra.mxu0 %v275
    %v483 = vpop.f32.mrf.mxu0
    %v484 = vadd.f32 %v151, %v483
    %v485 = vpop.f32.mrf.mxu0
    %v486 = vadd.f32 %v151, %v485
    %487 = vmatmul.bf16.gmra.mxu0 %v277
    %v488 = vpop.f32.mrf.mxu0
    %v489 = vadd.f32 %v151, %v488
    %v490 = vpop.f32.mrf.mxu0
    %v491 = vadd.f32 %v151, %v490
    %492 = vmatmul.bf16.gmra.mxu0 %v279
    %v493 = vpop.f32.mrf.mxu0
    %v494 = vadd.f32 %v151, %v493
    %v495 = vpop.f32.mrf.mxu0
    %v496 = vadd.f32 %v151, %v495
    %497 = vdwg.mxu0
    %498 = vmatpush.bf16.msra.mxu0 %v392
    %499 = vmatpush.bf16.msra.mxu0 %v391
    %500 = vmatpush.bf16.msra.mxu0 %v390
    %501 = vmatpush.bf16.msra.mxu0 %v389
    %502 = vmatpush.bf16.msra.mxu0 %v388
    %503 = vmatpush.bf16.msra.mxu0 %v387
    %504 = vmatpush.bf16.msra.mxu0 %v386
    %505 = vmatpush.bf16.msra.mxu0 %v385
    %506 = vmatmul.bf16.gmra.mxu0 %v250
    %v507 = vpop.f32.mrf.mxu0
    %v508 = vadd.f32 %v419, %v507
    %v509 = vpop.f32.mrf.mxu0
    %v510 = vadd.f32 %v421, %v509
    %511 = vmatmul.bf16.gmra.mxu0 %v252
    %v512 = vpop.f32.mrf.mxu0
    %v513 = vadd.f32 %v424, %v512
    %v514 = vpop.f32.mrf.mxu0
    %v515 = vadd.f32 %v426, %v514
    %516 = vmatmul.bf16.gmra.mxu0 %v254
    %v517 = vpop.f32.mrf.mxu0
    %v518 = vadd.f32 %v429, %v517
    %v519 = vpop.f32.mrf.mxu0
    %v520 = vadd.f32 %v431, %v519
    %521 = vmatmul.bf16.gmra.mxu0 %v256
    %v522 = vpop.f32.mrf.mxu0
    %v523 = vadd.f32 %v434, %v522
    %v524 = vpop.f32.mrf.mxu0
    %v525 = vadd.f32 %v436, %v524
    %526 = vmatmul.bf16.gmra.mxu0 %v258
    %v527 = vpop.f32.mrf.mxu0
    %v528 = vadd.f32 %v439, %v527
    %v529 = vpop.f32.mrf.mxu0
    %v530 = vadd.f32 %v441, %v529
    %531 = vmatmul.bf16.gmra.mxu0 %v260
    %v532 = vpop.f32.mrf.mxu0
    %v533 = vadd.f32 %v444, %v532
    %v534 = vpop.f32.mrf.mxu0
    %v535 = vadd.f32 %v446, %v534
    %536 = vmatmul.bf16.gmra.mxu0 %v262
    %v537 = vpop.f32.mrf.mxu0
    %v538 = vadd.f32 %v449, %v537
    %v539 = vpop.f32.mrf.mxu0
    %v540 = vadd.f32 %v451, %v539
    %541 = vmatmul.bf16.gmra.mxu0 %v264
    %v542 = vpop.f32.mrf.mxu0
    %v543 = vadd.f32 %v454, %v542
    %v544 = vpop.f32.mrf.mxu0
    %v545 = vadd.f32 %v456, %v544
    %546 = vmatmul.bf16.gmra.mxu0 %v266
    %v547 = vpop.f32.mrf.mxu0
    %v548 = vadd.f32 %v459, %v547
    %v549 = vpop.f32.mrf.mxu0
    %v550 = vadd.f32 %v461, %v549
    %551 = vmatmul.bf16.gmra.mxu0 %v268
    %v552 = vpop.f32.mrf.mxu0
    %v553 = vadd.f32 %v464, %v552
    %v554 = vpop.f32.mrf.mxu0
    %v555 = vadd.f32 %v466, %v554
    %556 = vmatmul.bf16.gmra.mxu0 %v270
    %v557 = vpop.f32.mrf.mxu0
    %v558 = vadd.f32 %v469, %v557
    %v559 = vpop.f32.mrf.mxu0
    %v560 = vadd.f32 %v471, %v559
    %561 = vmatmul.bf16.gmra.mxu0 %v272
    %v562 = vpop.f32.mrf.mxu0
    %v563 = vadd.f32 %v474, %v562
    %v564 = vpop.f32.mrf.mxu0
    %v565 = vadd.f32 %v476, %v564
    %566 = vmatmul.bf16.gmra.mxu0 %v274
    %v567 = vpop.f32.mrf.mxu0
    %v568 = vadd.f32 %v479, %v567
    %v569 = vpop.f32.mrf.mxu0
    %v570 = vadd.f32 %v481, %v569
    %571 = vmatmul.bf16.gmra.mxu0 %v276
    %v572 = vpop.f32.mrf.mxu0
    %v573 = vadd.f32 %v484, %v572
    %v574 = vpop.f32.mrf.mxu0
    %v575 = vadd.f32 %v486, %v574
    %576 = vmatmul.bf16.gmra.mxu0 %v278
    %v577 = vpop.f32.mrf.mxu0
    %v578 = vadd.f32 %v489, %v577
    %v579 = vpop.f32.mrf.mxu0
    %v580 = vadd.f32 %v491, %v579
    %581 = vmatmul.bf16.gmra.mxu0 %v280
    %v582 = vpop.f32.mrf.mxu0
    %v583 = vadd.f32 %v494, %v582
    %v584 = vpop.f32.mrf.mxu0
    %v585 = vadd.f32 %v496, %v584
    %586 = vdwg.mxu0
    %v587 = vmax.f32 %v508, 0.0
    %v588 = vmax.f32 %v510, 0.0
    %v589 = vmax.f32 %v513, 0.0
    %v590 = vmax.f32 %v515, 0.0
    %v591 = vmax.f32 %v518, 0.0
    %v592 = vmax.f32 %v520, 0.0
    %v593 = vmax.f32 %v523, 0.0
    %v594 = vmax.f32 %v525, 0.0
    %v595 = vmax.f32 %v528, 0.0
    %v596 = vmax.f32 %v530, 0.0
    %v597 = vmax.f32 %v533, 0.0
    %v598 = vmax.f32 %v535, 0.0
    %v599 = vmax.f32 %v538, 0.0
    %v600 = vmax.f32 %v540, 0.0
    %v601 = vmax.f32 %v543, 0.0
    %v602 = vmax.f32 %v545, 0.0
    %v603 = vmax.f32 %v548, 0.0
    %v604 = vmax.f32 %v550, 0.0
    %v605 = vmax.f32 %v553, 0.0
    %v606 = vmax.f32 %v555, 0.0
    %v607 = vmax.f32 %v558, 0.0
    %v608 = vmax.f32 %v560, 0.0
    %v609 = vmax.f32 %v563, 0.0
    %v610 = vmax.f32 %v565, 0.0
    %v611 = vmax.f32 %v568, 0.0
    %v612 = vmax.f32 %v570, 0.0
    %v613 = vmax.f32 %v573, 0.0
    %v614 = vmax.f32 %v575, 0.0
    %v615 = vmax.f32 %v578, 0.0
    %v616 = vmax.f32 %v580, 0.0
    %v617 = vmax.f32 %v583, 0.0
    %v618 = vmax.f32 %v585, 0.0
    %v619 = vpack.c.bf16 %v588, %v587
    %v620 = vpack.c.bf16 %v590, %v589
    %v621 = vpack.c.bf16 %v592, %v591
    %v622 = vpack.c.bf16 %v594, %v593
    %v623 = vpack.c.bf16 %v596, %v595
    %v624 = vpack.c.bf16 %v598, %v597
    %v625 = vpack.c.bf16 %v600, %v599
    %v626 = vpack.c.bf16 %v602, %v601
    %v627 = vpack.c.bf16 %v604, %v603
    %v628 = vpack.c.bf16 %v606, %v605
    %v629 = vpack.c.bf16 %v608, %v607
    %v630 = vpack.c.bf16 %v610, %v609
    %v631 = vpack.c.bf16 %v612, %v611
    %v632 = vpack.c.bf16 %v614, %v613
    %v633 = vpack.c.bf16 %v616, %v615
    %v634 = vpack.c.bf16 %v618, %v617
    %v635 = vld [vmem:[#allocation7] sm:$0xf]
    %v636 = vld [vmem:[#allocation7 + $0x4] sm:$0xf]
    %v637 = vld [vmem:[#allocation7 + $0x8] sm:$0xf]
    %v638 = vld [vmem:[#allocation7 + $0xc] sm:$0xf]
    %v639 = vld [vmem:[#allocation7 + $0x10] sm:$0xf]
    %v640 = vld [vmem:[#allocation7 + $0x14] sm:$0xf]
    %v641 = vld [vmem:[#allocation7 + $0x18] sm:$0xf]
    %v642 = vld [vmem:[#allocation7 + $0x1c] sm:$0xf]
    %v643 = vld [vmem:[#allocation7 + $0x20] sm:$0xf]
    %v644 = vld [vmem:[#allocation7 + $0x24] sm:$0xf]
    %v645 = vld [vmem:[#allocation7 + $0x28] sm:$0xf]
    %v646 = vld [vmem:[#allocation7 + $0x2c] sm:$0xf]
    %v647 = vld [vmem:[#allocation7 + $0x30] sm:$0xf]
    %v648 = vld [vmem:[#allocation7 + $0x34] sm:$0xf]
    %v649 = vld [vmem:[#allocation7 + $0x38] sm:$0xf]
    %v650 = vld [vmem:[#allocation7 + $0x3c] sm:$0xf]
    %v667 = vunpack.c.l.b16 %v635
    %v668 = vunpack.c.l.b16 %v636
    %v669 = vunpack.c.l.b16 %v637
    %v670 = vunpack.c.l.b16 %v638
    %v671 = vunpack.c.l.b16 %v639
    %v672 = vunpack.c.l.b16 %v640
    %v673 = vunpack.c.l.b16 %v641
    %v674 = vunpack.c.l.b16 %v642
    %v675 = vunpack.c.l.b16 %v643
    %v676 = vunpack.c.l.b16 %v644
    %v677 = vunpack.c.l.b16 %v645
    %v678 = vunpack.c.l.b16 %v646
    %v679 = vunpack.c.l.b16 %v647
    %v680 = vunpack.c.l.b16 %v648
    %v681 = vunpack.c.l.b16 %v649
    %v682 = vunpack.c.l.b16 %v650
    %v683 = vpack.c.b16 %v668, %v667
    %v684 = vpack.c.b16 %v670, %v669
    %v685 = vpack.c.b16 %v672, %v671
    %v686 = vpack.c.b16 %v674, %v673
    %v687 = vpack.c.b16 %v676, %v675
    %v688 = vpack.c.b16 %v678, %v677
    %v689 = vpack.c.b16 %v680, %v679
    %v690 = vpack.c.b16 %v682, %v681
    %699 = vmatpush.bf16.msra.mxu0 %v690
    %700 = vmatpush.bf16.msra.mxu0 %v689
    %701 = vmatpush.bf16.msra.mxu0 %v688
    %702 = vmatpush.bf16.msra.mxu0 %v687
    %703 = vmatpush.bf16.msra.mxu0 %v686
    %704 = vmatpush.bf16.msra.mxu0 %v685
    %705 = vmatpush.bf16.msra.mxu0 %v684
    %706 = vmatpush.bf16.msra.mxu0 %v683
    %707 = vmatmul.bf16.gmra.mxu0 %v619
    %v708 = vpop.f32.mrf.mxu0
    %v709 = vadd.f32 0.0, %v708
    %v710 = vpop.f32.mrf.mxu0
    %v711 = vadd.f32 0.0, %v710
    %712 = vmatmul.bf16.gmra.mxu0 %v620
    %v713 = vpop.f32.mrf.mxu0
    %v714 = vadd.f32 0.0, %v713
    %v715 = vpop.f32.mrf.mxu0
    %v716 = vadd.f32 0.0, %v715
    %717 = vmatmul.bf16.gmra.mxu0 %v621
    %v718 = vpop.f32.mrf.mxu0
    %v719 = vadd.f32 0.0, %v718
    %v720 = vpop.f32.mrf.mxu0
    %v721 = vadd.f32 0.0, %v720
    %722 = vmatmul.bf16.gmra.mxu0 %v622
    %v723 = vpop.f32.mrf.mxu0
    %v724 = vadd.f32 0.0, %v723
    %v725 = vpop.f32.mrf.mxu0
    %v726 = vadd.f32 0.0, %v725
    %727 = vmatmul.bf16.gmra.mxu0 %v623
    %v728 = vpop.f32.mrf.mxu0
    %v729 = vadd.f32 0.0, %v728
    %v730 = vpop.f32.mrf.mxu0
    %v731 = vadd.f32 0.0, %v730
    %732 = vmatmul.bf16.gmra.mxu0 %v624
    %v733 = vpop.f32.mrf.mxu0
    %v734 = vadd.f32 0.0, %v733
    %v735 = vpop.f32.mrf.mxu0
    %v736 = vadd.f32 0.0, %v735
    %737 = vmatmul.bf16.gmra.mxu0 %v625
    %v738 = vpop.f32.mrf.mxu0
    %v739 = vadd.f32 0.0, %v738
    %v740 = vpop.f32.mrf.mxu0
    %v741 = vadd.f32 0.0, %v740
    %742 = vmatmul.bf16.gmra.mxu0 %v626
    %v743 = vpop.f32.mrf.mxu0
    %v744 = vadd.f32 0.0, %v743
    %v745 = vpop.f32.mrf.mxu0
    %v746 = vadd.f32 0.0, %v745
    %747 = vmatmul.bf16.gmra.mxu0 %v627
    %v748 = vpop.f32.mrf.mxu0
    %v749 = vadd.f32 0.0, %v748
    %v750 = vpop.f32.mrf.mxu0
    %v751 = vadd.f32 0.0, %v750
    %752 = vmatmul.bf16.gmra.mxu0 %v628
    %v753 = vpop.f32.mrf.mxu0
    %v754 = vadd.f32 0.0, %v753
    %v755 = vpop.f32.mrf.mxu0
    %v756 = vadd.f32 0.0, %v755
    %757 = vmatmul.bf16.gmra.mxu0 %v629
    %v758 = vpop.f32.mrf.mxu0
    %v759 = vadd.f32 0.0, %v758
    %v760 = vpop.f32.mrf.mxu0
    %v761 = vadd.f32 0.0, %v760
    %762 = vmatmul.bf16.gmra.mxu0 %v630
    %v763 = vpop.f32.mrf.mxu0
    %v764 = vadd.f32 0.0, %v763
    %v765 = vpop.f32.mrf.mxu0
    %v766 = vadd.f32 0.0, %v765
    %767 = vmatmul.bf16.gmra.mxu0 %v631
    %v768 = vpop.f32.mrf.mxu0
    %v769 = vadd.f32 0.0, %v768
    %v770 = vpop.f32.mrf.mxu0
    %v771 = vadd.f32 0.0, %v770
    %772 = vmatmul.bf16.gmra.mxu0 %v632
    %v773 = vpop.f32.mrf.mxu0
    %v774 = vadd.f32 0.0, %v773
    %v775 = vpop.f32.mrf.mxu0
    %v776 = vadd.f32 0.0, %v775
    %777 = vmatmul.bf16.gmra.mxu0 %v633
    %v778 = vpop.f32.mrf.mxu0
    %v779 = vadd.f32 0.0, %v778
    %v780 = vpop.f32.mrf.mxu0
    %v781 = vadd.f32 0.0, %v780
    %782 = vmatmul.bf16.gmra.mxu0 %v634
    %v783 = vpop.f32.mrf.mxu0
    %v784 = vadd.f32 0.0, %v783
    %v785 = vpop.f32.mrf.mxu0
    %v786 = vadd.f32 0.0, %v785
    %787 = vdwg.mxu0
    %v788 = vpack.c.bf16 %v711, %v709
    %v789 = vpack.c.bf16 %v716, %v714
    %v790 = vpack.c.bf16 %v721, %v719
    %v791 = vpack.c.bf16 %v726, %v724
    %v792 = vpack.c.bf16 %v731, %v729
    %v793 = vpack.c.bf16 %v736, %v734
    %v794 = vpack.c.bf16 %v741, %v739
    %v795 = vpack.c.bf16 %v746, %v744
    %v796 = vpack.c.bf16 %v751, %v749
    %v797 = vpack.c.bf16 %v756, %v754
    %v798 = vpack.c.bf16 %v761, %v759
    %v799 = vpack.c.bf16 %v766, %v764
    %v800 = vpack.c.bf16 %v771, %v769
    %v801 = vpack.c.bf16 %v776, %v774
    %v802 = vpack.c.bf16 %v781, %v779
    %v803 = vpack.c.bf16 %v786, %v784
    %v804 = vld [vmem:[%s4] sm:$0x1]
    %v806 = vperm.slane %v804, 0
    %808 = vmatpush.bf16.msra.mxu0 %v795
    %809 = vmatpush.bf16.msra.mxu0 %v794
    %810 = vmatpush.bf16.msra.mxu0 %v793
    %811 = vmatpush.bf16.msra.mxu0 %v792
    %812 = vmatpush.bf16.msra.mxu0 %v791
    %813 = vmatpush.bf16.msra.mxu0 %v790
    %814 = vmatpush.bf16.msra.mxu0 %v789
    %815 = vmatpush.bf16.msra.mxu0 %v788
    %816 = vmatmul.bf16.gmra.mxu0 %v249
    %v817 = vpop.f32.mrf.mxu0
    %v818 = vadd.f32 %v806, %v817
    %v819 = vpop.f32.mrf.mxu0
    %v820 = vadd.f32 %v806, %v819
    %821 = vmatmul.bf16.gmra.mxu0 %v251
    %v822 = vpop.f32.mrf.mxu0
    %v823 = vadd.f32 %v806, %v822
    %v824 = vpop.f32.mrf.mxu0
    %v825 = vadd.f32 %v806, %v824
    %826 = vmatmul.bf16.gmra.mxu0 %v253
    %v827 = vpop.f32.mrf.mxu0
    %v828 = vadd.f32 %v806, %v827
    %v829 = vpop.f32.mrf.mxu0
    %v830 = vadd.f32 %v806, %v829
    %831 = vmatmul.bf16.gmra.mxu0 %v255
    %v832 = vpop.f32.mrf.mxu0
    %v833 = vadd.f32 %v806, %v832
    %v834 = vpop.f32.mrf.mxu0
    %v835 = vadd.f32 %v806, %v834
    %836 = vmatmul.bf16.gmra.mxu0 %v257
    %v837 = vpop.f32.mrf.mxu0
    %v838 = vadd.f32 %v806, %v837
    %v839 = vpop.f32.mrf.mxu0
    %v840 = vadd.f32 %v806, %v839
    %841 = vmatmul.bf16.gmra.mxu0 %v259
    %v842 = vpop.f32.mrf.mxu0
    %v843 = vadd.f32 %v806, %v842
    %v844 = vpop.f32.mrf.mxu0
    %v845 = vadd.f32 %v806, %v844
    %846 = vmatmul.bf16.gmra.mxu0 %v261
    %v847 = vpop.f32.mrf.mxu0
    %v848 = vadd.f32 %v806, %v847
    %v849 = vpop.f32.mrf.mxu0
    %v850 = vadd.f32 %v806, %v849
    %851 = vmatmul.bf16.gmra.mxu0 %v263
    %v852 = vpop.f32.mrf.mxu0
    %v853 = vadd.f32 %v806, %v852
    %v854 = vpop.f32.mrf.mxu0
    %v855 = vadd.f32 %v806, %v854
    %856 = vmatmul.bf16.gmra.mxu0 %v265
    %v857 = vpop.f32.mrf.mxu0
    %v858 = vadd.f32 %v806, %v857
    %v859 = vpop.f32.mrf.mxu0
    %v860 = vadd.f32 %v806, %v859
    %861 = vmatmul.bf16.gmra.mxu0 %v267
    %v862 = vpop.f32.mrf.mxu0
    %v863 = vadd.f32 %v806, %v862
    %v864 = vpop.f32.mrf.mxu0
    %v865 = vadd.f32 %v806, %v864
    %866 = vmatmul.bf16.gmra.mxu0 %v269
    %v867 = vpop.f32.mrf.mxu0
    %v868 = vadd.f32 %v806, %v867
    %v869 = vpop.f32.mrf.mxu0
    %v870 = vadd.f32 %v806, %v869
    %871 = vmatmul.bf16.gmra.mxu0 %v271
    %v872 = vpop.f32.mrf.mxu0
    %v873 = vadd.f32 %v806, %v872
    %v874 = vpop.f32.mrf.mxu0
    %v875 = vadd.f32 %v806, %v874
    %876 = vmatmul.bf16.gmra.mxu0 %v273
    %v877 = vpop.f32.mrf.mxu0
    %v878 = vadd.f32 %v806, %v877
    %v879 = vpop.f32.mrf.mxu0
    %v880 = vadd.f32 %v806, %v879
    %881 = vmatmul.bf16.gmra.mxu0 %v275
    %v882 = vpop.f32.mrf.mxu0
    %v883 = vadd.f32 %v806, %v882
    %v884 = vpop.f32.mrf.mxu0
    %v885 = vadd.f32 %v806, %v884
    %886 = vmatmul.bf16.gmra.mxu0 %v277
    %v887 = vpop.f32.mrf.mxu0
    %v888 = vadd.f32 %v806, %v887
    %v889 = vpop.f32.mrf.mxu0
    %v890 = vadd.f32 %v806, %v889
    %891 = vmatmul.bf16.gmra.mxu0 %v279
    %v892 = vpop.f32.mrf.mxu0
    %v893 = vadd.f32 %v806, %v892
    %v894 = vpop.f32.mrf.mxu0
    %v895 = vadd.f32 %v806, %v894
    %896 = vdwg.mxu0
    %897 = vmatpush.bf16.msra.mxu0 %v803
    %898 = vmatpush.bf16.msra.mxu0 %v802
    %899 = vmatpush.bf16.msra.mxu0 %v801
    %900 = vmatpush.bf16.msra.mxu0 %v800
    %901 = vmatpush.bf16.msra.mxu0 %v799
    %902 = vmatpush.bf16.msra.mxu0 %v798
    %903 = vmatpush.bf16.msra.mxu0 %v797
    %904 = vmatpush.bf16.msra.mxu0 %v796
    %905 = vmatmul.bf16.gmra.mxu0 %v250
    %v906 = vpop.f32.mrf.mxu0
    %v907 = vadd.f32 %v818, %v906
    %v908 = vpop.f32.mrf.mxu0
    %v909 = vadd.f32 %v820, %v908
    %910 = vmatmul.bf16.gmra.mxu0 %v252
    %v911 = vpop.f32.mrf.mxu0
    %v912 = vadd.f32 %v823, %v911
    %v913 = vpop.f32.mrf.mxu0
    %v914 = vadd.f32 %v825, %v913
    %915 = vmatmul.bf16.gmra.mxu0 %v254
    %v916 = vpop.f32.mrf.mxu0
    %v917 = vadd.f32 %v828, %v916
    %v918 = vpop.f32.mrf.mxu0
    %v919 = vadd.f32 %v830, %v918
    %920 = vmatmul.bf16.gmra.mxu0 %v256
    %v921 = vpop.f32.mrf.mxu0
    %v922 = vadd.f32 %v833, %v921
    %v923 = vpop.f32.mrf.mxu0
    %v924 = vadd.f32 %v835, %v923
    %925 = vmatmul.bf16.gmra.mxu0 %v258
    %v926 = vpop.f32.mrf.mxu0
    %v927 = vadd.f32 %v838, %v926
    %v928 = vpop.f32.mrf.mxu0
    %v929 = vadd.f32 %v840, %v928
    %930 = vmatmul.bf16.gmra.mxu0 %v260
    %v931 = vpop.f32.mrf.mxu0
    %v932 = vadd.f32 %v843, %v931
    %v933 = vpop.f32.mrf.mxu0
    %v934 = vadd.f32 %v845, %v933
    %935 = vmatmul.bf16.gmra.mxu0 %v262
    %v936 = vpop.f32.mrf.mxu0
    %v937 = vadd.f32 %v848, %v936
    %v938 = vpop.f32.mrf.mxu0
    %v939 = vadd.f32 %v850, %v938
    %940 = vmatmul.bf16.gmra.mxu0 %v264
    %v941 = vpop.f32.mrf.mxu0
    %v942 = vadd.f32 %v853, %v941
    %v943 = vpop.f32.mrf.mxu0
    %v944 = vadd.f32 %v855, %v943
    %945 = vmatmul.bf16.gmra.mxu0 %v266
    %v946 = vpop.f32.mrf.mxu0
    %v947 = vadd.f32 %v858, %v946
    %v948 = vpop.f32.mrf.mxu0
    %v949 = vadd.f32 %v860, %v948
    %950 = vmatmul.bf16.gmra.mxu0 %v268
    %v951 = vpop.f32.mrf.mxu0
    %v952 = vadd.f32 %v863, %v951
    %v953 = vpop.f32.mrf.mxu0
    %v954 = vadd.f32 %v865, %v953
    %955 = vmatmul.bf16.gmra.mxu0 %v270
    %v956 = vpop.f32.mrf.mxu0
    %v957 = vadd.f32 %v868, %v956
    %v958 = vpop.f32.mrf.mxu0
    %v959 = vadd.f32 %v870, %v958
    %960 = vmatmul.bf16.gmra.mxu0 %v272
    %v961 = vpop.f32.mrf.mxu0
    %v962 = vadd.f32 %v873, %v961
    %v963 = vpop.f32.mrf.mxu0
    %v964 = vadd.f32 %v875, %v963
    %965 = vmatmul.bf16.gmra.mxu0 %v274
    %v966 = vpop.f32.mrf.mxu0
    %v967 = vadd.f32 %v878, %v966
    %v968 = vpop.f32.mrf.mxu0
    %v969 = vadd.f32 %v880, %v968
    %970 = vmatmul.bf16.gmra.mxu0 %v276
    %v971 = vpop.f32.mrf.mxu0
    %v972 = vadd.f32 %v883, %v971
    %v973 = vpop.f32.mrf.mxu0
    %v974 = vadd.f32 %v885, %v973
    %975 = vmatmul.bf16.gmra.mxu0 %v278
    %v976 = vpop.f32.mrf.mxu0
    %v977 = vadd.f32 %v888, %v976
    %v978 = vpop.f32.mrf.mxu0
    %v979 = vadd.f32 %v890, %v978
    %980 = vmatmul.bf16.gmra.mxu0 %v280
    %v981 = vpop.f32.mrf.mxu0
    %v982 = vadd.f32 %v893, %v981
    %v983 = vpop.f32.mrf.mxu0
    %v984 = vadd.f32 %v895, %v983
    %985 = vdwg.mxu0
    %v986 = vld [vmem:[#allocation8] sm:$0xff]
    %v987 = vld [vmem:[#allocation8 + $0x8] sm:$0xff]
    %988 = vmatpush.msra.mxu0 %v944
    %989 = vmatpush.msra.mxu0 %v942
    %990 = vmatpush.msra.mxu0 %v939
    %991 = vmatpush.msra.mxu0 %v937
    %992 = vmatpush.msra.mxu0 %v934
    %993 = vmatpush.msra.mxu0 %v932
    %994 = vmatpush.msra.mxu0 %v929
    %995 = vmatpush.msra.mxu0 %v927
    %996 = vmatpush.msra.mxu0 %v924
    %997 = vmatpush.msra.mxu0 %v922
    %998 = vmatpush.msra.mxu0 %v919
    %999 = vmatpush.msra.mxu0 %v917
    %1000 = vmatpush.msra.mxu0 %v914
    %1001 = vmatpush.msra.mxu0 %v912
    %1002 = vmatpush.msra.mxu0 %v909
    %1003 = vmatpush.msra.mxu0 %v907
    %1004 = vmatmul.f32.gmra.mxu0 %v986
    %v1005 = vpop.f32.mrf.mxu0
    %v1006 = vadd.f32 0.0, %v1005
    %1007 = vdwg.mxu0
    %1008 = vmatpush.msra.mxu0 %v984
    %1009 = vmatpush.msra.mxu0 %v982
    %1010 = vmatpush.msra.mxu0 %v979
    %1011 = vmatpush.msra.mxu0 %v977
    %1012 = vmatpush.msra.mxu0 %v974
    %1013 = vmatpush.msra.mxu0 %v972
    %1014 = vmatpush.msra.mxu0 %v969
    %1015 = vmatpush.msra.mxu0 %v967
    %1016 = vmatpush.msra.mxu0 %v964
    %1017 = vmatpush.msra.mxu0 %v962
    %1018 = vmatpush.msra.mxu0 %v959
    %1019 = vmatpush.msra.mxu0 %v957
    %1020 = vmatpush.msra.mxu0 %v954
    %1021 = vmatpush.msra.mxu0 %v952
    %1022 = vmatpush.msra.mxu0 %v949
    %1023 = vmatpush.msra.mxu0 %v947
    %1024 = vmatmul.f32.gmra.mxu0 %v987
    %v1025 = vpop.f32.mrf.mxu0
    %v1026 = vadd.f32 %v1006, %v1025
    %1027 = vdwg.mxu0
    %1028 = vst [vmem:[#allocation10] sm:$0xff] %v1026
    // Predicated region
    $region42: #{tpu_custom_call.1} parent=1 // pred_check
      _
    $region43: #{tpu_custom_call.1} parent=1 // pred_check_branch
      %1030 = sbr.rel (0) target = $region45
    $region44: #{tpu_custom_call.1} parent=1 // pred_region
      %1032 = vsyncadd [#allocation4], 0
      %s1034 = sshll.u32 [#allocation10], 4
      %s1035 = int_to_ptr.vmem [resolvable:$true] %s1034
      %s1036 = sshll.u32 %s6, 4
      %s1037 = int_to_ptr.hbm [resolvable:$true] %s1036
      %1039 = dma.vmem_to_hbm [thread:$0]  %s1035, 128, %s1037, [#allocation4]
    $region45: #{tpu_custom_call.1} parent=1 // pred_fallthru
      _
    // Predicated region
    $region46: #{tpu_custom_call.1} parent=1 // pred_check
      _
    $region47: #{tpu_custom_call.1} parent=1 // pred_check_branch
      %1041 = sbr.rel (0) target = $region49
    $region48: #{tpu_custom_call.1} parent=1 // pred_region
      %1043 = dma.done [#allocation4], 128
    $region49: #{tpu_custom_call.1} parent=1 // pred_fallthru
      _
    %1044 = vsyncpa [#allocation3], 1
    %1045 = vsyncpa [#allocation6], 1
    %1046 = vsyncpa [#allocation9], 1
    %1047 = vsyncpa [#allocation4], 1

</llo_original>
